<compile_context>
chip_gen: v7x
topology: tpu7x:2x2x1
jax: 0.10.0
libtpu: 0.0.40
codegen_flags: <defaults>
</compile_context>

<pallas_src>
import jax
import jax.numpy as jnp
from jax.experimental import pallas as pl
from jax.experimental.pallas import tpu as pltpu

_GOLDEN = 0x9E3779B9
_MAX_BLOCK_BYTES = 2 * 1024 * 1024   # ~2 MiB f32 block per grid step


def _seeded_dropout_kernel(ints_ref, flts_ref, idx_ref, x_ref, o_ref):
    # ints_ref = [seed_mix, threshold_bits] (SMEM int32); flts_ref = [scale] (SMEM f32).
    block_rows, lane = x_ref.shape

    # Scalar (sreg) per-step base: global row offset * lane + seed*GOLDEN.
    row0 = (pl.program_id(0) * block_rows).astype(jnp.uint32)
    base = row0 * jnp.uint32(lane) + ints_ref[0].astype(jnp.uint32)

    # Per-element counter = flat element index + seed mix.  idx_ref holds the
    # precomputed block-local flat index (r*lane + c) and stays resident in
    # VMEM across grid steps, so this is a single vector add.
    h = idx_ref[...] + base

    # murmur3 fmix32 finalizer -> ~uniform 32 random bits per element.
    h = h ^ (h >> 16)
    h = h * jnp.uint32(0x85EBCA6B)
    h = h ^ (h >> 13)
    h = h * jnp.uint32(0xC2B2AE35)
    h = h ^ (h >> 16)

    # Integer keep-test: keep iff random_bits > uint32(p * 2^32)  (matches `rand > p`).
    thresh = ints_ref[1].astype(jnp.uint32)
    scale = flts_ref[0]                       # 1 / (1 - p), precomputed on host
    o_ref[...] = jnp.where(h > thresh, x_ref[...] * scale, jnp.float32(0.0))


def _as_int32(u: int) -> int:
    """Bit-preserving view of a uint32 value as a Python int in int32 range."""
    u &= 0xFFFFFFFF
    return u - (1 << 32) if u >= (1 << 31) else u


def _pick_lane(n: int):
    """Widest lane width (multiple of 128) dividing n, else pad fallback."""
    for lane in (512, 256, 128):
        if n % lane == 0:
            return lane, False
    return 512, True


def seeded_dropout(x: jax.Array, p: float, seed: int) -> jax.Array:
    assert x.dtype == jnp.float32
    orig_shape = x.shape
    flat = x.reshape(-1)                      # contiguous flatten: no extra HBM pass
    n = flat.shape[0]
    assert n > 0
    # NOTE: flat offsets are uint32; randomness repeats past 2^32 elements.
    assert n < (1 << 32)

    lane, ragged = _pick_lane(n)
    if ragged:
        # Ragged sizes only: zero-pad to a lane multiple (extra HBM pass).
        n_pad = pl.cdiv(n, lane) * lane
        flat = jnp.pad(flat, (0, n_pad - n))
    else:
        n_pad = n
    rows = n_pad // lane
    x2d = flat.reshape(rows, lane)

    # Big lane-dense blocks spanning the full lane dim (one contiguous DMA each).
    max_rows = max(_MAX_BLOCK_BYTES // (lane * 4), 8)
    block_rows = rows if rows <= max_rows else max_rows
    grid = (pl.cdiv(rows, block_rows),)

    # Resident block-local flat-index slab (r*lane + c); DMA'd once per core.
    idx2d = jnp.arange(block_rows * lane, dtype=jnp.uint32).reshape(block_rows, lane)

    # Host-side scalar precompute.
    p = float(p)
    thresh = min(max(int(round(p * 4294967296.0)), 0), 0xFFFFFFFF)
    scale = 1.0 / (1.0 - p) if p < 1.0 else 0.0
    seed_mix = (int(seed) * _GOLDEN) & 0xFFFFFFFF

    ints = jnp.asarray([_as_int32(seed_mix), _as_int32(thresh)], dtype=jnp.int32)
    flts = jnp.asarray([scale], dtype=jnp.float32)

    out2d = pl.pallas_call(
        _seeded_dropout_kernel,
        out_shape=jax.ShapeDtypeStruct(x2d.shape, jnp.float32),
        grid_spec=pltpu.PrefetchScalarGridSpec(
            num_scalar_prefetch=2,
            grid=grid,
            in_specs=[
                # Index slab: same block every step -> copy elided, stays in VMEM.
                pl.BlockSpec((block_rows, lane), lambda i, ints_r, flts_r: (0, 0)),
                pl.BlockSpec((block_rows, lane), lambda i, ints_r, flts_r: (i, 0)),
            ],
            out_specs=pl.BlockSpec((block_rows, lane), lambda i, ints_r, flts_r: (i, 0)),
        ),
        compiler_params=pltpu.CompilerParams(
            # Randomness depends only on (seed, flat element index), so blocks
            # are order-independent -> safe to shard across v7x's two TCs.
            dimension_semantics=("parallel",),
            # ~12 MiB of double-buffered blocks; raise v5e's 16 MiB default.
            vmem_limit_bytes=32 * 1024 * 1024,
        ),
    )(ints, flts, idx2d, x2d)

    out_flat = out2d.reshape(-1)
    if ragged:
        out_flat = out_flat[:n]
    return out_flat.reshape(orig_shape)


if __name__ == "__main__":
    import numpy as np

    key = jax.random.PRNGKey(0)
    x = jax.random.normal(key, (2, 4, 16, 16), dtype=jnp.float32)
    p = 0.3
    seed = 1234

    out = jax.block_until_ready(seeded_dropout(x, p, seed))
    out_np = np.asarray(jax.device_get(out))
    x_np = np.asarray(jax.device_get(x))

    # Shape/dtype preserved; kept elements are exactly x / (1 - p); dropped are 0.
    assert out_np.shape == x_np.shape and out_np.dtype == x_np.dtype
    kept = out_np != 0.0
    np.testing.assert_allclose(out_np[kept], x_np[kept] / (1.0 - p), rtol=1e-5)

    # Drop fraction roughly p (loose bound — sanity check of the hash).
    drop_frac = 1.0 - kept.mean()
    assert 0.15 < drop_frac < 0.45, drop_frac

    # Deterministic with the same seed.
    out2 = jax.block_until_ready(seeded_dropout(x, p, seed))
    np.testing.assert_array_equal(out_np, np.asarray(jax.device_get(out2)))

    print("KERNEL_OK")
</pallas_src>

<mosaic_0001>
module attributes {stable_mosaic.version = 11 : i64} {
  func.func @_seeded_dropout_kernel(%arg0: i32, %arg1: memref<2xi32, #tpu.memory_space<smem>>, %arg2: memref<1xf32, #tpu.memory_space<smem>>, %arg3: memref<4x512xi32, #tpu.memory_space<vmem>>, %arg4: memref<4x512xf32, #tpu.memory_space<vmem>>, %arg5: memref<4x512xf32, #tpu.memory_space<vmem>>) attributes {dimension_semantics = [#tpu.dimension_semantics<parallel>], iteration_bounds = array<i64: 1>, scalar_prefetch = 2 : i64, scratch_operands = 0 : i64, tpu.core_type = #tpu.core_type<tc>, window_params = [{pipeline_mode = #tpu.pipeline_mode<synchronous>, transform_indices = @transform_0, window_bounds = array<i64: 4, 512>}, {transform_indices = @transform_1, window_bounds = array<i64: 4, 512>}, {transform_indices = @transform_2, window_bounds = array<i64: 4, 512>}]} {
    %c4_i32 = arith.constant 4 : i32
    %0 = arith.muli %arg0, %c4_i32 : i32
    %c512_i32 = arith.constant 512 : i32
    %1 = arith.muli %0, %c512_i32 : i32
    %c0 = arith.constant 0 : index
    %2 = memref.load %arg1[%c0] : memref<2xi32, #tpu.memory_space<smem>>
    %3 = arith.addi %1, %2 : i32
    %c0_0 = arith.constant 0 : index
    %c0_1 = arith.constant 0 : index
    %4 = vector.load %arg3[%c0_0, %c0_1] : memref<4x512xi32, #tpu.memory_space<vmem>>, vector<4x512xi32>
    %5 = vector.broadcast %3 : i32 to vector<4x512xi32>
    %6 = arith.addi %4, %5 : vector<4x512xi32>
    %c16_i32 = arith.constant 16 : i32
    %7 = vector.broadcast %c16_i32 : i32 to vector<4x512xi32>
    %8 = arith.shrui %6, %7 : vector<4x512xi32>
    %9 = arith.xori %6, %8 : vector<4x512xi32>
    %c-2048144789_i32 = arith.constant -2048144789 : i32
    %10 = vector.broadcast %c-2048144789_i32 : i32 to vector<4x512xi32>
    %11 = arith.muli %9, %10 : vector<4x512xi32>
    %c13_i32 = arith.constant 13 : i32
    %12 = vector.broadcast %c13_i32 : i32 to vector<4x512xi32>
    %13 = arith.shrui %11, %12 : vector<4x512xi32>
    %14 = arith.xori %11, %13 : vector<4x512xi32>
    %c-1028477387_i32 = arith.constant -1028477387 : i32
    %15 = vector.broadcast %c-1028477387_i32 : i32 to vector<4x512xi32>
    %16 = arith.muli %14, %15 : vector<4x512xi32>
    %c16_i32_2 = arith.constant 16 : i32
    %17 = vector.broadcast %c16_i32_2 : i32 to vector<4x512xi32>
    %18 = arith.shrui %16, %17 : vector<4x512xi32>
    %19 = arith.xori %16, %18 : vector<4x512xi32>
    %c1 = arith.constant 1 : index
    %20 = memref.load %arg1[%c1] : memref<2xi32, #tpu.memory_space<smem>>
    %c0_3 = arith.constant 0 : index
    %21 = memref.load %arg2[%c0_3] : memref<1xf32, #tpu.memory_space<smem>>
    %22 = vector.broadcast %20 : i32 to vector<4x512xi32>
    %23 = arith.cmpi ugt, %19, %22 : vector<4x512xi32>
    %c0_4 = arith.constant 0 : index
    %c0_5 = arith.constant 0 : index
    %24 = vector.load %arg4[%c0_4, %c0_5] : memref<4x512xf32, #tpu.memory_space<vmem>>, vector<4x512xf32>
    %25 = vector.broadcast %21 : f32 to vector<4x512xf32>
    %26 = arith.mulf %24, %25 : vector<4x512xf32>
    %cst = arith.constant 0.000000e+00 : f32
    %27 = vector.broadcast %cst : f32 to vector<4x512xf32>
    %28 = arith.select %23, %26, %27 : vector<4x512xi1>, vector<4x512xf32>
    %c0_6 = arith.constant 0 : index
    %c0_7 = arith.constant 0 : index
    %29 = vector.load %arg5[%c0_6, %c0_7] : memref<4x512xf32, #tpu.memory_space<vmem>>, vector<4x512xf32>
    tpu.vector_store %arg5[%c0_6, %c0_7], %28 {strides = array<i32>} : memref<4x512xf32, #tpu.memory_space<vmem>>, vector<4x512xf32>,
    return
  }
  func.func @transform_0(%arg0: i32, %arg1: memref<2xi32, #tpu.memory_space<smem>>, %arg2: memref<1xf32, #tpu.memory_space<smem>>) -> (i32, i32) {
    %c0_i32 = arith.constant 0 : i32
    %c0_i32_0 = arith.constant 0 : i32
    %c0_i32_1 = arith.constant 0 : i32
    return %c0_i32, %c0_i32_0 : i32, i32
  }
  func.func @transform_1(%arg0: i32, %arg1: memref<2xi32, #tpu.memory_space<smem>>, %arg2: memref<1xf32, #tpu.memory_space<smem>>) -> (i32, i32) {
    %c0_i32 = arith.constant 0 : i32
    %c0_i32_0 = arith.constant 0 : i32
    return %arg0, %c0_i32 : i32, i32
  }
  func.func @transform_2(%arg0: i32, %arg1: memref<2xi32, #tpu.memory_space<smem>>, %arg2: memref<1xf32, #tpu.memory_space<smem>>) -> (i32, i32) {
    %c0_i32 = arith.constant 0 : i32
    %c0_i32_0 = arith.constant 0 : i32
    return %arg0, %c0_i32 : i32, i32
  }
}

</mosaic_0001>

<llo_original>
// kernel: tpu_custom_call.1
$region0: #{tpu_custom_call.1}
  #allocation0 [shape = 'u32[]', space=smem, size = 0x4, offset = 0x4, fixed_abs, tag = 'smem constant byte address 0x4 - core index']
  #allocation1 [shape = 'u32[144,128]{1,0:T(1,128)}', space=vmem, size = 0x12000, scoped, tag = 'internal scratch']
  #allocation2 [shape = 's32[1]{0}', space=sflag, size = 0x4, scoped, tag = 'scoped memory for tpu_custom_call.1']
  #allocation3 [shape = 'u8[512]{0}', space=smem, size = 0x200, scoped, tag = 'prefetched SMEM operand 0']
  #allocation4 [shape = 'f32[1]{0:T(128)S(6)}', space=smem, size = 0x200, scoped, tag = 'prefetched SMEM operand 1']
  %s0 = inlined_call_operand.vmem [shape: s32[2], index: 0, kind: input, shape index: {}]
  %s1 = inlined_call_operand.<no memory space> [shape: f32[1], index: 1, kind: input, shape index: {}]
  %s2 = inlined_call_operand.hbm [shape: u32[4,512], index: 2, kind: input, shape index: {}]
  %s3 = inlined_call_operand.hbm [shape: f32[4,512], index: 3, kind: input, shape index: {}]
  %s4 = inlined_call_operand.hbm [shape: f32[4,512], index: 4, kind: output, shape index: {}]
  %s5 = sld [smem:[#allocation0]]
  $region26: #{tpu_custom_call.1} parent=0
    _
  %s7 = ssub.s32 1, %s5
  %s8 = scalar_select 0, %s7, %s5
  %s9 = sshll.u32 %s0, 4
  %s10 = int_to_ptr.vmem [resolvable:$true] %s9
  %12 = dma.vmem_to_smem %s10, 16, [#allocation3], [#allocation2]
  %13 = sst [smem:[#allocation4]] %s1
  %14 = dma.done [#allocation2], 16
  %15 = sfence
  $region1: #{tpu_custom_call.1} parent=0
    #allocation5 [shape = 'u8[8192]{0}', space=vmem, size = 0x2000, scoped, tag = 'input window, operand 2, single buffered']
    #allocation6 [shape = 's32[1]{0}', space=sflag, size = 0x4, scoped, tag = 'scoped memory for tpu_custom_call.1']
    #allocation7 [shape = 's32[1]{0}', space=sflag, size = 0x4, scoped, tag = 'scoped memory for tpu_custom_call.1']
    #allocation8 [shape = 'u8[8192]{0}', space=vmem, size = 0x2000, scoped, tag = 'input window, operand 3, single buffered']
    #allocation9 [shape = 's32[1]{0}', space=sflag, size = 0x4, scoped, tag = 'scoped memory for tpu_custom_call.1']
    #allocation10 [shape = 'u8[8192]{0}', space=vmem, size = 0x2000, scoped, tag = 'output window, operand 0, single buffered']
    %16 = vsyncpa [#allocation6], 0
    %17 = vsyncpa [#allocation9], 0
    %18 = vsyncpa [#allocation7], 0
    // Predicated region
    $region2: #{tpu_custom_call.1} parent=1 // pred_check
      _
    $region3: #{tpu_custom_call.1} parent=1 // pred_check_branch
      %20 = sbr.rel (0) target = $region5
    $region4: #{tpu_custom_call.1} parent=1 // pred_region
      %s22 = ssub.s32 256, 256
      %23 = vsyncadd [#allocation6], %s22
      %s25 = sshll.u32 [#allocation5], 4
      %s26 = int_to_ptr.vmem [resolvable:$true] %s25
      %28 = dma.hbm_to_vmem [thread:$0]  %s2, 256, %s26, [#allocation6]
    $region5: #{tpu_custom_call.1} parent=1 // pred_fallthru
      _
    // Predicated region
    $region6: #{tpu_custom_call.1} parent=1 // pred_check
      _
    $region7: #{tpu_custom_call.1} parent=1 // pred_check_branch
      %30 = sbr.rel (0) target = $region9
    $region8: #{tpu_custom_call.1} parent=1 // pred_region
      %s32 = ssub.s32 256, 256
      %33 = vsyncadd [#allocation9], %s32
      %s35 = sshll.u32 [#allocation8], 4
      %s36 = int_to_ptr.vmem [resolvable:$true] %s35
      %38 = dma.hbm_to_vmem [thread:$0]  %s3, 256, %s36, [#allocation9]
    $region9: #{tpu_custom_call.1} parent=1 // pred_fallthru
      _
    // Predicated region
    $region10: #{tpu_custom_call.1} parent=1 // pred_check
      _
    $region11: #{tpu_custom_call.1} parent=1 // pred_check_branch
      %40 = sbr.rel (0) target = $region13
    $region12: #{tpu_custom_call.1} parent=1 // pred_region
      %41 = dma.done [#allocation6], 256
    $region13: #{tpu_custom_call.1} parent=1 // pred_fallthru
      _
    // Predicated region
    $region14: #{tpu_custom_call.1} parent=1 // pred_check
      _
    $region15: #{tpu_custom_call.1} parent=1 // pred_check_branch
      %43 = sbr.rel (0) target = $region17
    $region16: #{tpu_custom_call.1} parent=1 // pred_region
      %44 = dma.done [#allocation9], 256
    $region17: #{tpu_custom_call.1} parent=1 // pred_fallthru
      _
    %s45 = smul.u32 0, 2048
    %s46 = sld [smem:[#allocation3]]
    %s47 = sadd.s32 %s45, %s46
    %v48 = vld [vmem:[#allocation5] sm:$0xff]
    %v49 = vld [vmem:[#allocation5 + $0x8] sm:$0xff]
    %v50 = vstv %s47
    %v51 = vadd.s32 %v48, %v50
    %v52 = vadd.s32 %v49, %v50
    %v53 = vshrl.u32 %v51, 16
    %v54 = vshrl.u32 %v52, 16
    %v55 = vxor.u32 %v51, %v53
    %v56 = vxor.u32 %v52, %v54
    %v57 = vmul.u32 %v55, 2246822507
    %v58 = vmul.u32 %v56, 2246822507
    %v59 = vshrl.u32 %v57, 13
    %v60 = vshrl.u32 %v58, 13
    %v61 = vxor.u32 %v57, %v59
    %v62 = vxor.u32 %v58, %v60
    %v63 = vmul.u32 %v61, 3266489909
    %v64 = vmul.u32 %v62, 3266489909
    %v65 = vshrl.u32 %v63, 16
    %v66 = vshrl.u32 %v64, 16
    %v67 = vxor.u32 %v63, %v65
    %v68 = vxor.u32 %v64, %v66
    %s69 = sld [smem:[#allocation3 + $0x1]]
    %s70 = sld [smem:[#allocation4]]
    %v71 = vstv %s69
    %vm72 = vcmp.gt.u32.totalorder %v67, %v71
    %vm73 = vcmp.gt.u32.totalorder %v68, %v71
    %v74 = vld [vmem:[#allocation8] sm:$0xff]
    %v75 = vld [vmem:[#allocation8 + $0x8] sm:$0xff]
    %v76 = vstv %s70
    %v77 = vmul.f32 %v74, %v76
    %v78 = vmul.f32 %v75, %v76
    %v79 = vsel %vm72, %v77, 0.0
    %v80 = vsel %vm73, %v78, 0.0
    %81 = vst [vmem:[#allocation10] sm:$0xff] %v79
    %82 = vst [vmem:[#allocation10 + $0x8] sm:$0xff] %v80
    // Predicated region
    $region18: #{tpu_custom_call.1} parent=1 // pred_check
      _
    $region19: #{tpu_custom_call.1} parent=1 // pred_check_branch
      %84 = sbr.rel (0) target = $region21
    $region20: #{tpu_custom_call.1} parent=1 // pred_region
      %s86 = ssub.s32 256, 256
      %87 = vsyncadd [#allocation7], %s86
      %s89 = sshll.u32 [#allocation10], 4
      %s90 = int_to_ptr.vmem [resolvable:$true] %s89
      %92 = dma.vmem_to_hbm [thread:$0]  %s90, 256, %s4, [#allocation7]
    $region21: #{tpu_custom_call.1} parent=1 // pred_fallthru
      _
    // Predicated region
    $region22: #{tpu_custom_call.1} parent=1 // pred_check
      _
    $region23: #{tpu_custom_call.1} parent=1 // pred_check_branch
      %94 = sbr.rel (0) target = $region25
    $region24: #{tpu_custom_call.1} parent=1 // pred_region
      %95 = dma.done [#allocation7], 256
    $region25: #{tpu_custom_call.1} parent=1 // pred_fallthru
      _
    %96 = vsyncpa [#allocation6], 1
    %97 = vsyncpa [#allocation9], 1
    %98 = vsyncpa [#allocation7], 1

</llo_original>
